<compile_context>
chip_gen: v7x
topology: tpu7x:2x2x1
jax: 0.10.0
libtpu: 0.0.40
codegen_flags: <defaults>
</compile_context>

<pallas_src>
import jax
import jax.numpy as jnp
from jax.experimental import pallas as pl
from jax.experimental.pallas import tpu as pltpu

# ----------------------------------------------------------------------------
# Model hyper-parameters
# ----------------------------------------------------------------------------
NC = 1      # input channels
NDF = 8     # base feature width
SEQ = 64    # input signal length
BATCH = 2

K, S, P = 4, 2, 1          # conv kernel / stride / padding
LRELU_SLOPE = 0.2
BN_EPS = 1e-5

CHANNELS = [NC, NDF, NDF * 2, NDF * 4, NDF * 8]      # 1, 8, 16, 32, 64
LENS = [SEQ // (2 ** i) for i in range(5)]           # 64, 32, 16, 8, 4

_VMEM = pl.BlockSpec(memory_space=pltpu.MemorySpace.VMEM)


# ----------------------------------------------------------------------------
# Single fused Pallas kernel: conv x4 (+BN affine +LeakyReLU) -> FC -> sigmoid
# ----------------------------------------------------------------------------
def _disc_kernel(cols0_ref,
                 w0, s0, b0, w1, s1, b1, w2, s2, b2, w3, s3, b3,
                 wfc, bfc,
                 o_ref,
                 p1, p2, p3):
    ws = [w0, w1, w2, w3]
    scales = [s0, s1, s2, s3]
    biases = [b0, b1, b2, b3]
    pads = [None, p1, p2, p3]   # zero-padded NLC activation (input of layer i)

    # Zero the padded scratch buffers once; interiors are overwritten below,
    # only the 1-row halo per batch must stay zero (it is the conv padding).
    for p in (p1, p2, p3):
        p[...] = jnp.zeros(p.shape, p.dtype)

    h = None
    for i in range(4):
        lin, lout = LENS[i], LENS[i + 1]
        if i == 0:
            # layer-0 im2col was built outside the kernel (static slices only)
            cols = cols0_ref[...]                              # [B*lout, K*NC]
        else:
            # im2col via stride-2 reads from the padded activation:
            #   cols[b*lout + lo, k*cin + c] = act_pad[b, 2*lo + k, c]
            cols = jnp.concatenate(
                [jnp.concatenate(
                    [pads[i][pl.ds(b * (lin + 2) + k, lout, stride=2), :]
                     for k in range(K)],
                    axis=-1)
                 for b in range(BATCH)],
                axis=0)                                        # [B*lout, K*cin]

        y = jnp.dot(cols, ws[i][...], preferred_element_type=jnp.float32)
        y = y * scales[i][...] + biases[i][...]                # eval-mode BN affine
        h = jnp.where(y >= 0.0, y, LRELU_SLOPE * y)            # LeakyReLU(0.2)
        # Dropout1d(0.2): identity in eval mode.

        if i < 3:
            # Stage into the next layer's padded scratch (rows 1..lout per batch).
            for b in range(BATCH):
                base = b * (lout + 2)
                pads[i + 1][base + 1: base + 1 + lout, :] = \
                    h[b * lout:(b + 1) * lout, :]

    # Final FC + sigmoid.  h is [B*4, 64] in NLC; wfc was reordered at init so
    # this contraction matches PyTorch's channel-major x.view(B, -1) @ W.T.
    lf = LENS[-1]
    probs = []
    for b in range(BATCH):
        hb = h[b * lf:(b + 1) * lf, :]                          # [lf, Cout]
        row = jnp.sum(hb * wfc[...], axis=1, keepdims=True)     # [lf, 1]   lane reduce
        logit = jnp.sum(row, axis=0, keepdims=True) + bfc[...]  # [1, 1]    sublane reduce
        probs.append(1.0 / (1.0 + jnp.exp(-logit)))             # sigmoid (EUP)
    o_ref[...] = jnp.concatenate(probs, axis=0)                 # [B, 1]


# ----------------------------------------------------------------------------
# Plain-JAX glue (tiny, runs once per forward): layer-0 im2col, static slices
# ----------------------------------------------------------------------------
def _im2col_first(x):
    # x: [B, NC, L] (NCL)  ->  cols: [B*Lout, K*NC], row b*Lout+lo, col k*NC+c
    b, c, l = x.shape
    lout = l // S
    xp = jnp.pad(x, ((0, 0), (0, 0), (P, P)))                   # [B, C, L+2]
    taps = [xp[:, :, k:k + 2 * lout:S] for k in range(K)]       # K x [B, C, lout]
    cols = jnp.stack(taps, axis=2)                              # [B, C, K, lout]
    cols = jnp.transpose(cols, (0, 3, 2, 1)).reshape(b * lout, K * c)
    return cols


# ----------------------------------------------------------------------------
# Parameter construction (deterministic, synthetic) — kernel-ready layouts
# ----------------------------------------------------------------------------
def init_params(key):
    params = {"w": [], "scale": [], "bias": []}
    for i in range(4):
        cin, cout = CHANNELS[i], CHANNELS[i + 1]
        key, kw = jax.random.split(key)
        w_pt = jax.random.normal(kw, (cout, cin, K), jnp.float32) * 0.05   # PyTorch layout
        # Kernel layout [K*cin, cout]: row k*cin + c  <->  w_pt[cout, c, k]
        params["w"].append(jnp.transpose(w_pt, (2, 1, 0)).reshape(K * cin, cout))
        if i == 0:
            scale = jnp.ones((cout,), jnp.float32)               # no BN after conv 0
            bias = jnp.zeros((cout,), jnp.float32)
        else:
            key, kg, kb, km, kv = jax.random.split(key, 5)
            gamma = 1.0 + 0.1 * jax.random.normal(kg, (cout,), jnp.float32)
            beta = 0.1 * jax.random.normal(kb, (cout,), jnp.float32)
            mean = 0.1 * jax.random.normal(km, (cout,), jnp.float32)
            var = jnp.abs(jax.random.normal(kv, (cout,), jnp.float32)) + 1.0
            scale = gamma / jnp.sqrt(var + BN_EPS)               # fused eval-mode BN
            bias = beta - mean * scale
        params["scale"].append(scale.reshape(1, cout))
        params["bias"].append(bias.reshape(1, cout))

    l_final = LENS[-1]                      # 4
    c_final = CHANNELS[-1]                  # 64
    feat = c_final * l_final                # 256 = LazyLinear in_features
    key, kw, kb = jax.random.split(key, 3)
    w_fc_pt = jax.random.normal(kw, (1, feat), jnp.float32) * 0.05   # PyTorch [out=1, in]
    # Reorder so it contracts with the NLC activation [l, c] exactly like
    # PyTorch's channel-major view(B, -1):  wfc[l, c] = w_fc_pt[0, c*l_final + l]
    params["wfc"] = w_fc_pt.reshape(c_final, l_final).T              # [l_final, c_final]
    params["bfc"] = (0.01 * jax.random.normal(kb, (1,), jnp.float32)).reshape(1, 1)
    return params


# ----------------------------------------------------------------------------
# Forward pass: one fused pallas_call
# ----------------------------------------------------------------------------
@jax.jit
def discriminator_forward(x, params):
    # x: [B, NC, L]  (NCL, same as PyTorch)
    cols0 = _im2col_first(x.astype(jnp.float32))                 # [B*L/2, K*NC]
    args = [cols0]
    for i in range(4):
        args += [params["w"][i], params["scale"][i], params["bias"][i]]
    args += [params["wfc"], params["bfc"]]

    return pl.pallas_call(
        _disc_kernel,
        out_shape=jax.ShapeDtypeStruct((BATCH, 1), jnp.float32),
        in_specs=[_VMEM] * len(args),
        out_specs=_VMEM,
        scratch_shapes=[
            pltpu.VMEM((BATCH * (LENS[1] + 2), CHANNELS[1]), jnp.float32),  # 68 x 8
            pltpu.VMEM((BATCH * (LENS[2] + 2), CHANNELS[2]), jnp.float32),  # 36 x 16
            pltpu.VMEM((BATCH * (LENS[3] + 2), CHANNELS[3]), jnp.float32),  # 20 x 32
        ],
    )(*args)


# ----------------------------------------------------------------------------
# Main
# ----------------------------------------------------------------------------
if __name__ == "__main__":
    key = jax.random.PRNGKey(0)
    key, kx, kp = jax.random.split(key, 3)

    x = jax.random.normal(kx, (BATCH, NC, SEQ), jnp.float32)
    params = init_params(kp)

    out = discriminator_forward(x, params)
    jax.block_until_ready(out)

    assert out.shape == (BATCH, 1)
    assert bool(jnp.all(jnp.isfinite(out)))
    assert bool(jnp.all((out >= 0.0) & (out <= 1.0)))
    print("KERNEL_OK")
</pallas_src>

<mosaic_0001>
module attributes {stable_mosaic.version = 11 : i64} {
  func.func @_disc_kernel(%arg0: memref<64x4xf32, #tpu.memory_space<vmem>>, %arg1: memref<4x8xf32, #tpu.memory_space<vmem>>, %arg2: memref<1x8xf32, #tpu.memory_space<vmem>>, %arg3: memref<1x8xf32, #tpu.memory_space<vmem>>, %arg4: memref<32x16xf32, #tpu.memory_space<vmem>>, %arg5: memref<1x16xf32, #tpu.memory_space<vmem>>, %arg6: memref<1x16xf32, #tpu.memory_space<vmem>>, %arg7: memref<64x32xf32, #tpu.memory_space<vmem>>, %arg8: memref<1x32xf32, #tpu.memory_space<vmem>>, %arg9: memref<1x32xf32, #tpu.memory_space<vmem>>, %arg10: memref<128x64xf32, #tpu.memory_space<vmem>>, %arg11: memref<1x64xf32, #tpu.memory_space<vmem>>, %arg12: memref<1x64xf32, #tpu.memory_space<vmem>>, %arg13: memref<4x64xf32, #tpu.memory_space<vmem>>, %arg14: memref<1x1xf32, #tpu.memory_space<vmem>>, %arg15: memref<2x1xf32, #tpu.memory_space<vmem>>, %arg16: memref<68x8xf32, #tpu.memory_space<vmem>>, %arg17: memref<36x16xf32, #tpu.memory_space<vmem>>, %arg18: memref<20x32xf32, #tpu.memory_space<vmem>>) attributes {dimension_semantics = [], scalar_prefetch = 0 : i64, scratch_operands = 3 : i64, tpu.core_type = #tpu.core_type<tc>} {
    %cst = arith.constant 0.000000e+00 : f32
    %0 = vector.broadcast %cst : f32 to vector<68x8xf32>
    %c0 = arith.constant 0 : index
    %c0_0 = arith.constant 0 : index
    %1 = vector.load %arg16[%c0, %c0_0] : memref<68x8xf32, #tpu.memory_space<vmem>>, vector<68x8xf32>
    tpu.vector_store %arg16[%c0, %c0_0], %0 {strides = array<i32>} : memref<68x8xf32, #tpu.memory_space<vmem>>, vector<68x8xf32>,
    %cst_1 = arith.constant 0.000000e+00 : f32
    %2 = vector.broadcast %cst_1 : f32 to vector<36x16xf32>
    %c0_2 = arith.constant 0 : index
    %c0_3 = arith.constant 0 : index
    %3 = vector.load %arg17[%c0_2, %c0_3] : memref<36x16xf32, #tpu.memory_space<vmem>>, vector<36x16xf32>
    tpu.vector_store %arg17[%c0_2, %c0_3], %2 {strides = array<i32>} : memref<36x16xf32, #tpu.memory_space<vmem>>, vector<36x16xf32>,
    %cst_4 = arith.constant 0.000000e+00 : f32
    %4 = vector.broadcast %cst_4 : f32 to vector<20x32xf32>
    %c0_5 = arith.constant 0 : index
    %c0_6 = arith.constant 0 : index
    %5 = vector.load %arg18[%c0_5, %c0_6] : memref<20x32xf32, #tpu.memory_space<vmem>>, vector<20x32xf32>
    tpu.vector_store %arg18[%c0_5, %c0_6], %4 {strides = array<i32>} : memref<20x32xf32, #tpu.memory_space<vmem>>, vector<20x32xf32>,
    %c0_7 = arith.constant 0 : index
    %c0_8 = arith.constant 0 : index
    %6 = vector.load %arg0[%c0_7, %c0_8] : memref<64x4xf32, #tpu.memory_space<vmem>>, vector<64x4xf32>
    %c0_9 = arith.constant 0 : index
    %c0_10 = arith.constant 0 : index
    %7 = vector.load %arg1[%c0_9, %c0_10] : memref<4x8xf32, #tpu.memory_space<vmem>>, vector<4x8xf32>
    %cst_11 = arith.constant dense<0.000000e+00> : vector<64x8xf32>
    %8 = tpu.matmul %6, %7, %cst_11 {dimension_numbers = #tpu.dot_dimension_numbers<[1], [0], [0], [1], [0, 0, 1, 1], [], []>} : vector<64x4xf32>, vector<4x8xf32>, vector<64x8xf32> -> vector<64x8xf32>
    %c0_12 = arith.constant 0 : index
    %c0_13 = arith.constant 0 : index
    %9 = vector.load %arg2[%c0_12, %c0_13] : memref<1x8xf32, #tpu.memory_space<vmem>>, vector<1x8xf32>
    %10 = vector.broadcast %9 : vector<1x8xf32> to vector<64x8xf32>
    %11 = arith.mulf %8, %10 : vector<64x8xf32>
    %c0_14 = arith.constant 0 : index
    %c0_15 = arith.constant 0 : index
    %12 = vector.load %arg3[%c0_14, %c0_15] : memref<1x8xf32, #tpu.memory_space<vmem>>, vector<1x8xf32>
    %13 = vector.broadcast %12 : vector<1x8xf32> to vector<64x8xf32>
    %14 = arith.addf %11, %13 : vector<64x8xf32>
    %cst_16 = arith.constant 0.000000e+00 : f32
    %15 = vector.broadcast %cst_16 : f32 to vector<64x8xf32>
    %16 = arith.cmpf oge, %14, %15 : vector<64x8xf32>
    %cst_17 = arith.constant 2.000000e-01 : f32
    %17 = vector.broadcast %cst_17 : f32 to vector<64x8xf32>
    %18 = arith.mulf %17, %14 : vector<64x8xf32>
    %19 = arith.select %16, %14, %18 : vector<64x8xi1>, vector<64x8xf32>
    %20 = vector.extract_strided_slice %19 {offsets = [0, 0], sizes = [32, 8], strides = [1, 1]} : vector<64x8xf32> to vector<32x8xf32>
    %c1 = arith.constant 1 : index
    %c0_18 = arith.constant 0 : index
    %21 = vector.load %arg16[%c1, %c0_18] : memref<68x8xf32, #tpu.memory_space<vmem>>, vector<32x8xf32>
    tpu.vector_store %arg16[%c1, %c0_18], %20 {strides = array<i32>} : memref<68x8xf32, #tpu.memory_space<vmem>>, vector<32x8xf32>,
    %22 = vector.extract_strided_slice %19 {offsets = [32, 0], sizes = [32, 8], strides = [1, 1]} : vector<64x8xf32> to vector<32x8xf32>
    %c35 = arith.constant 35 : index
    %c0_19 = arith.constant 0 : index
    %23 = vector.load %arg16[%c35, %c0_19] : memref<68x8xf32, #tpu.memory_space<vmem>>, vector<32x8xf32>
    tpu.vector_store %arg16[%c35, %c0_19], %22 {strides = array<i32>} : memref<68x8xf32, #tpu.memory_space<vmem>>, vector<32x8xf32>,
    %c0_20 = arith.constant 0 : index
    %c0_21 = arith.constant 0 : index
    %24 = tpu.strided_load %arg16[%c0_20, %c0_21] {strides = array<i32: 2, 1>} : memref<68x8xf32, #tpu.memory_space<vmem>>, vector<16x8xf32>
    %c1_22 = arith.constant 1 : index
    %c0_23 = arith.constant 0 : index
    %25 = tpu.strided_load %arg16[%c1_22, %c0_23] {strides = array<i32: 2, 1>} : memref<68x8xf32, #tpu.memory_space<vmem>>, vector<16x8xf32>
    %c2 = arith.constant 2 : index
    %c0_24 = arith.constant 0 : index
    %26 = tpu.strided_load %arg16[%c2, %c0_24] {strides = array<i32: 2, 1>} : memref<68x8xf32, #tpu.memory_space<vmem>>, vector<16x8xf32>
    %c3 = arith.constant 3 : index
    %c0_25 = arith.constant 0 : index
    %27 = tpu.strided_load %arg16[%c3, %c0_25] {strides = array<i32: 2, 1>} : memref<68x8xf32, #tpu.memory_space<vmem>>, vector<16x8xf32>
    %28 = tpu.concatenate %24, %25, %26, %27 in 1 : vector<16x8xf32>, vector<16x8xf32>, vector<16x8xf32>, vector<16x8xf32> -> vector<16x32xf32>
    %c34 = arith.constant 34 : index
    %c0_26 = arith.constant 0 : index
    %29 = tpu.strided_load %arg16[%c34, %c0_26] {strides = array<i32: 2, 1>} : memref<68x8xf32, #tpu.memory_space<vmem>>, vector<16x8xf32>
    %c35_27 = arith.constant 35 : index
    %c0_28 = arith.constant 0 : index
    %30 = tpu.strided_load %arg16[%c35_27, %c0_28] {strides = array<i32: 2, 1>} : memref<68x8xf32, #tpu.memory_space<vmem>>, vector<16x8xf32>
    %c36 = arith.constant 36 : index
    %c0_29 = arith.constant 0 : index
    %31 = tpu.strided_load %arg16[%c36, %c0_29] {strides = array<i32: 2, 1>} : memref<68x8xf32, #tpu.memory_space<vmem>>, vector<16x8xf32>
    %c37 = arith.constant 37 : index
    %c0_30 = arith.constant 0 : index
    %32 = tpu.strided_load %arg16[%c37, %c0_30] {strides = array<i32: 2, 1>} : memref<68x8xf32, #tpu.memory_space<vmem>>, vector<16x8xf32>
    %33 = tpu.concatenate %29, %30, %31, %32 in 1 : vector<16x8xf32>, vector<16x8xf32>, vector<16x8xf32>, vector<16x8xf32> -> vector<16x32xf32>
    %34 = tpu.concatenate %28, %33 in 0 : vector<16x32xf32>, vector<16x32xf32> -> vector<32x32xf32>
    %c0_31 = arith.constant 0 : index
    %c0_32 = arith.constant 0 : index
    %35 = vector.load %arg4[%c0_31, %c0_32] : memref<32x16xf32, #tpu.memory_space<vmem>>, vector<32x16xf32>
    %cst_33 = arith.constant dense<0.000000e+00> : vector<32x16xf32>
    %36 = tpu.matmul %34, %35, %cst_33 {dimension_numbers = #tpu.dot_dimension_numbers<[1], [0], [0], [1], [0, 0, 1, 1], [], []>} : vector<32x32xf32>, vector<32x16xf32>, vector<32x16xf32> -> vector<32x16xf32>
    %c0_34 = arith.constant 0 : index
    %c0_35 = arith.constant 0 : index
    %37 = vector.load %arg5[%c0_34, %c0_35] : memref<1x16xf32, #tpu.memory_space<vmem>>, vector<1x16xf32>
    %38 = vector.broadcast %37 : vector<1x16xf32> to vector<32x16xf32>
    %39 = arith.mulf %36, %38 : vector<32x16xf32>
    %c0_36 = arith.constant 0 : index
    %c0_37 = arith.constant 0 : index
    %40 = vector.load %arg6[%c0_36, %c0_37] : memref<1x16xf32, #tpu.memory_space<vmem>>, vector<1x16xf32>
    %41 = vector.broadcast %40 : vector<1x16xf32> to vector<32x16xf32>
    %42 = arith.addf %39, %41 : vector<32x16xf32>
    %cst_38 = arith.constant 0.000000e+00 : f32
    %43 = vector.broadcast %cst_38 : f32 to vector<32x16xf32>
    %44 = arith.cmpf oge, %42, %43 : vector<32x16xf32>
    %cst_39 = arith.constant 2.000000e-01 : f32
    %45 = vector.broadcast %cst_39 : f32 to vector<32x16xf32>
    %46 = arith.mulf %45, %42 : vector<32x16xf32>
    %47 = arith.select %44, %42, %46 : vector<32x16xi1>, vector<32x16xf32>
    %48 = vector.extract_strided_slice %47 {offsets = [0, 0], sizes = [16, 16], strides = [1, 1]} : vector<32x16xf32> to vector<16x16xf32>
    %c1_40 = arith.constant 1 : index
    %c0_41 = arith.constant 0 : index
    %49 = vector.load %arg17[%c1_40, %c0_41] : memref<36x16xf32, #tpu.memory_space<vmem>>, vector<16x16xf32>
    tpu.vector_store %arg17[%c1_40, %c0_41], %48 {strides = array<i32>} : memref<36x16xf32, #tpu.memory_space<vmem>>, vector<16x16xf32>,
    %50 = vector.extract_strided_slice %47 {offsets = [16, 0], sizes = [16, 16], strides = [1, 1]} : vector<32x16xf32> to vector<16x16xf32>
    %c19 = arith.constant 19 : index
    %c0_42 = arith.constant 0 : index
    %51 = vector.load %arg17[%c19, %c0_42] : memref<36x16xf32, #tpu.memory_space<vmem>>, vector<16x16xf32>
    tpu.vector_store %arg17[%c19, %c0_42], %50 {strides = array<i32>} : memref<36x16xf32, #tpu.memory_space<vmem>>, vector<16x16xf32>,
    %c0_43 = arith.constant 0 : index
    %c0_44 = arith.constant 0 : index
    %52 = tpu.strided_load %arg17[%c0_43, %c0_44] {strides = array<i32: 2, 1>} : memref<36x16xf32, #tpu.memory_space<vmem>>, vector<8x16xf32>
    %c1_45 = arith.constant 1 : index
    %c0_46 = arith.constant 0 : index
    %53 = tpu.strided_load %arg17[%c1_45, %c0_46] {strides = array<i32: 2, 1>} : memref<36x16xf32, #tpu.memory_space<vmem>>, vector<8x16xf32>
    %c2_47 = arith.constant 2 : index
    %c0_48 = arith.constant 0 : index
    %54 = tpu.strided_load %arg17[%c2_47, %c0_48] {strides = array<i32: 2, 1>} : memref<36x16xf32, #tpu.memory_space<vmem>>, vector<8x16xf32>
    %c3_49 = arith.constant 3 : index
    %c0_50 = arith.constant 0 : index
    %55 = tpu.strided_load %arg17[%c3_49, %c0_50] {strides = array<i32: 2, 1>} : memref<36x16xf32, #tpu.memory_space<vmem>>, vector<8x16xf32>
    %56 = tpu.concatenate %52, %53, %54, %55 in 1 : vector<8x16xf32>, vector<8x16xf32>, vector<8x16xf32>, vector<8x16xf32> -> vector<8x64xf32>
    %c18 = arith.constant 18 : index
    %c0_51 = arith.constant 0 : index
    %57 = tpu.strided_load %arg17[%c18, %c0_51] {strides = array<i32: 2, 1>} : memref<36x16xf32, #tpu.memory_space<vmem>>, vector<8x16xf32>
    %c19_52 = arith.constant 19 : index
    %c0_53 = arith.constant 0 : index
    %58 = tpu.strided_load %arg17[%c19_52, %c0_53] {strides = array<i32: 2, 1>} : memref<36x16xf32, #tpu.memory_space<vmem>>, vector<8x16xf32>
    %c20 = arith.constant 20 : index
    %c0_54 = arith.constant 0 : index
    %59 = tpu.strided_load %arg17[%c20, %c0_54] {strides = array<i32: 2, 1>} : memref<36x16xf32, #tpu.memory_space<vmem>>, vector<8x16xf32>
    %c21 = arith.constant 21 : index
    %c0_55 = arith.constant 0 : index
    %60 = tpu.strided_load %arg17[%c21, %c0_55] {strides = array<i32: 2, 1>} : memref<36x16xf32, #tpu.memory_space<vmem>>, vector<8x16xf32>
    %61 = tpu.concatenate %57, %58, %59, %60 in 1 : vector<8x16xf32>, vector<8x16xf32>, vector<8x16xf32>, vector<8x16xf32> -> vector<8x64xf32>
    %62 = tpu.concatenate %56, %61 in 0 : vector<8x64xf32>, vector<8x64xf32> -> vector<16x64xf32>
    %c0_56 = arith.constant 0 : index
    %c0_57 = arith.constant 0 : index
    %63 = vector.load %arg7[%c0_56, %c0_57] : memref<64x32xf32, #tpu.memory_space<vmem>>, vector<64x32xf32>
    %cst_58 = arith.constant dense<0.000000e+00> : vector<16x32xf32>
    %64 = tpu.matmul %62, %63, %cst_58 {dimension_numbers = #tpu.dot_dimension_numbers<[1], [0], [0], [1], [0, 0, 1, 1], [], []>} : vector<16x64xf32>, vector<64x32xf32>, vector<16x32xf32> -> vector<16x32xf32>
    %c0_59 = arith.constant 0 : index
    %c0_60 = arith.constant 0 : index
    %65 = vector.load %arg8[%c0_59, %c0_60] : memref<1x32xf32, #tpu.memory_space<vmem>>, vector<1x32xf32>
    %66 = vector.broadcast %65 : vector<1x32xf32> to vector<16x32xf32>
    %67 = arith.mulf %64, %66 : vector<16x32xf32>
    %c0_61 = arith.constant 0 : index
    %c0_62 = arith.constant 0 : index
    %68 = vector.load %arg9[%c0_61, %c0_62] : memref<1x32xf32, #tpu.memory_space<vmem>>, vector<1x32xf32>
    %69 = vector.broadcast %68 : vector<1x32xf32> to vector<16x32xf32>
    %70 = arith.addf %67, %69 : vector<16x32xf32>
    %cst_63 = arith.constant 0.000000e+00 : f32
    %71 = vector.broadcast %cst_63 : f32 to vector<16x32xf32>
    %72 = arith.cmpf oge, %70, %71 : vector<16x32xf32>
    %cst_64 = arith.constant 2.000000e-01 : f32
    %73 = vector.broadcast %cst_64 : f32 to vector<16x32xf32>
    %74 = arith.mulf %73, %70 : vector<16x32xf32>
    %75 = arith.select %72, %70, %74 : vector<16x32xi1>, vector<16x32xf32>
    %76 = vector.extract_strided_slice %75 {offsets = [0, 0], sizes = [8, 32], strides = [1, 1]} : vector<16x32xf32> to vector<8x32xf32>
    %c1_65 = arith.constant 1 : index
    %c0_66 = arith.constant 0 : index
    %77 = vector.load %arg18[%c1_65, %c0_66] : memref<20x32xf32, #tpu.memory_space<vmem>>, vector<8x32xf32>
    tpu.vector_store %arg18[%c1_65, %c0_66], %76 {strides = array<i32>} : memref<20x32xf32, #tpu.memory_space<vmem>>, vector<8x32xf32>,
    %78 = vector.extract_strided_slice %75 {offsets = [8, 0], sizes = [8, 32], strides = [1, 1]} : vector<16x32xf32> to vector<8x32xf32>
    %c11 = arith.constant 11 : index
    %c0_67 = arith.constant 0 : index
    %79 = vector.load %arg18[%c11, %c0_67] : memref<20x32xf32, #tpu.memory_space<vmem>>, vector<8x32xf32>
    tpu.vector_store %arg18[%c11, %c0_67], %78 {strides = array<i32>} : memref<20x32xf32, #tpu.memory_space<vmem>>, vector<8x32xf32>,
    %c0_68 = arith.constant 0 : index
    %c0_69 = arith.constant 0 : index
    %80 = tpu.strided_load %arg18[%c0_68, %c0_69] {strides = array<i32: 2, 1>} : memref<20x32xf32, #tpu.memory_space<vmem>>, vector<4x32xf32>
    %c1_70 = arith.constant 1 : index
    %c0_71 = arith.constant 0 : index
    %81 = tpu.strided_load %arg18[%c1_70, %c0_71] {strides = array<i32: 2, 1>} : memref<20x32xf32, #tpu.memory_space<vmem>>, vector<4x32xf32>
    %c2_72 = arith.constant 2 : index
    %c0_73 = arith.constant 0 : index
    %82 = tpu.strided_load %arg18[%c2_72, %c0_73] {strides = array<i32: 2, 1>} : memref<20x32xf32, #tpu.memory_space<vmem>>, vector<4x32xf32>
    %c3_74 = arith.constant 3 : index
    %c0_75 = arith.constant 0 : index
    %83 = tpu.strided_load %arg18[%c3_74, %c0_75] {strides = array<i32: 2, 1>} : memref<20x32xf32, #tpu.memory_space<vmem>>, vector<4x32xf32>
    %84 = tpu.concatenate %80, %81, %82, %83 in 1 : vector<4x32xf32>, vector<4x32xf32>, vector<4x32xf32>, vector<4x32xf32> -> vector<4x128xf32>
    %c10 = arith.constant 10 : index
    %c0_76 = arith.constant 0 : index
    %85 = tpu.strided_load %arg18[%c10, %c0_76] {strides = array<i32: 2, 1>} : memref<20x32xf32, #tpu.memory_space<vmem>>, vector<4x32xf32>
    %c11_77 = arith.constant 11 : index
    %c0_78 = arith.constant 0 : index
    %86 = tpu.strided_load %arg18[%c11_77, %c0_78] {strides = array<i32: 2, 1>} : memref<20x32xf32, #tpu.memory_space<vmem>>, vector<4x32xf32>
    %c12 = arith.constant 12 : index
    %c0_79 = arith.constant 0 : index
    %87 = tpu.strided_load %arg18[%c12, %c0_79] {strides = array<i32: 2, 1>} : memref<20x32xf32, #tpu.memory_space<vmem>>, vector<4x32xf32>
    %c13 = arith.constant 13 : index
    %c0_80 = arith.constant 0 : index
    %88 = tpu.strided_load %arg18[%c13, %c0_80] {strides = array<i32: 2, 1>} : memref<20x32xf32, #tpu.memory_space<vmem>>, vector<4x32xf32>
    %89 = tpu.concatenate %85, %86, %87, %88 in 1 : vector<4x32xf32>, vector<4x32xf32>, vector<4x32xf32>, vector<4x32xf32> -> vector<4x128xf32>
    %90 = tpu.concatenate %84, %89 in 0 : vector<4x128xf32>, vector<4x128xf32> -> vector<8x128xf32>
    %c0_81 = arith.constant 0 : index
    %c0_82 = arith.constant 0 : index
    %91 = vector.load %arg10[%c0_81, %c0_82] : memref<128x64xf32, #tpu.memory_space<vmem>>, vector<128x64xf32>
    %cst_83 = arith.constant dense<0.000000e+00> : vector<8x64xf32>
    %92 = tpu.matmul %90, %91, %cst_83 {dimension_numbers = #tpu.dot_dimension_numbers<[1], [0], [0], [1], [0, 0, 1, 1], [], []>} : vector<8x128xf32>, vector<128x64xf32>, vector<8x64xf32> -> vector<8x64xf32>
    %c0_84 = arith.constant 0 : index
    %c0_85 = arith.constant 0 : index
    %93 = vector.load %arg11[%c0_84, %c0_85] : memref<1x64xf32, #tpu.memory_space<vmem>>, vector<1x64xf32>
    %94 = vector.broadcast %93 : vector<1x64xf32> to vector<8x64xf32>
    %95 = arith.mulf %92, %94 : vector<8x64xf32>
    %c0_86 = arith.constant 0 : index
    %c0_87 = arith.constant 0 : index
    %96 = vector.load %arg12[%c0_86, %c0_87] : memref<1x64xf32, #tpu.memory_space<vmem>>, vector<1x64xf32>
    %97 = vector.broadcast %96 : vector<1x64xf32> to vector<8x64xf32>
    %98 = arith.addf %95, %97 : vector<8x64xf32>
    %cst_88 = arith.constant 0.000000e+00 : f32
    %99 = vector.broadcast %cst_88 : f32 to vector<8x64xf32>
    %100 = arith.cmpf oge, %98, %99 : vector<8x64xf32>
    %cst_89 = arith.constant 2.000000e-01 : f32
    %101 = vector.broadcast %cst_89 : f32 to vector<8x64xf32>
    %102 = arith.mulf %101, %98 : vector<8x64xf32>
    %103 = arith.select %100, %98, %102 : vector<8x64xi1>, vector<8x64xf32>
    %104 = vector.extract_strided_slice %103 {offsets = [0, 0], sizes = [4, 64], strides = [1, 1]} : vector<8x64xf32> to vector<4x64xf32>
    %c0_90 = arith.constant 0 : index
    %c0_91 = arith.constant 0 : index
    %105 = vector.load %arg13[%c0_90, %c0_91] : memref<4x64xf32, #tpu.memory_space<vmem>>, vector<4x64xf32>
    %106 = arith.mulf %104, %105 : vector<4x64xf32>
    %cst_92 = arith.constant dense<0.000000e+00> : vector<4xf32>
    %107 = vector.multi_reduction <add>, %106, %cst_92 [1] : vector<4x64xf32> to vector<4xf32>
    %108 = vector.shape_cast %107 : vector<4xf32> to vector<4x1xf32>
    %cst_93 = arith.constant dense<0.000000e+00> : vector<1xf32>
    %109 = vector.multi_reduction <add>, %108, %cst_93 [0] : vector<4x1xf32> to vector<1xf32>
    %110 = vector.shape_cast %109 : vector<1xf32> to vector<1x1xf32>
    %c0_94 = arith.constant 0 : index
    %c0_95 = arith.constant 0 : index
    %111 = vector.load %arg14[%c0_94, %c0_95] : memref<1x1xf32, #tpu.memory_space<vmem>>, vector<1x1xf32>
    %112 = arith.addf %110, %111 : vector<1x1xf32>
    %cst_96 = arith.constant 0.000000e+00 : f32
    %113 = vector.broadcast %cst_96 : f32 to vector<1x1xf32>
    %114 = arith.subf %113, %112 : vector<1x1xf32>
    %115 = math.exp %114 : vector<1x1xf32>
    %cst_97 = arith.constant 1.000000e+00 : f32
    %116 = vector.broadcast %cst_97 : f32 to vector<1x1xf32>
    %117 = arith.addf %116, %115 : vector<1x1xf32>
    %cst_98 = arith.constant 1.000000e+00 : f32
    %118 = vector.broadcast %cst_98 : f32 to vector<1x1xf32>
    %119 = arith.divf %118, %117 : vector<1x1xf32>
    %120 = vector.extract_strided_slice %103 {offsets = [4, 0], sizes = [4, 64], strides = [1, 1]} : vector<8x64xf32> to vector<4x64xf32>
    %c0_99 = arith.constant 0 : index
    %c0_100 = arith.constant 0 : index
    %121 = vector.load %arg13[%c0_99, %c0_100] : memref<4x64xf32, #tpu.memory_space<vmem>>, vector<4x64xf32>
    %122 = arith.mulf %120, %121 : vector<4x64xf32>
    %cst_101 = arith.constant dense<0.000000e+00> : vector<4xf32>
    %123 = vector.multi_reduction <add>, %122, %cst_101 [1] : vector<4x64xf32> to vector<4xf32>
    %124 = vector.shape_cast %123 : vector<4xf32> to vector<4x1xf32>
    %cst_102 = arith.constant dense<0.000000e+00> : vector<1xf32>
    %125 = vector.multi_reduction <add>, %124, %cst_102 [0] : vector<4x1xf32> to vector<1xf32>
    %126 = vector.shape_cast %125 : vector<1xf32> to vector<1x1xf32>
    %c0_103 = arith.constant 0 : index
    %c0_104 = arith.constant 0 : index
    %127 = vector.load %arg14[%c0_103, %c0_104] : memref<1x1xf32, #tpu.memory_space<vmem>>, vector<1x1xf32>
    %128 = arith.addf %126, %127 : vector<1x1xf32>
    %cst_105 = arith.constant 0.000000e+00 : f32
    %129 = vector.broadcast %cst_105 : f32 to vector<1x1xf32>
    %130 = arith.subf %129, %128 : vector<1x1xf32>
    %131 = math.exp %130 : vector<1x1xf32>
    %cst_106 = arith.constant 1.000000e+00 : f32
    %132 = vector.broadcast %cst_106 : f32 to vector<1x1xf32>
    %133 = arith.addf %132, %131 : vector<1x1xf32>
    %cst_107 = arith.constant 1.000000e+00 : f32
    %134 = vector.broadcast %cst_107 : f32 to vector<1x1xf32>
    %135 = arith.divf %134, %133 : vector<1x1xf32>
    %136 = tpu.concatenate %119, %135 in 0 : vector<1x1xf32>, vector<1x1xf32> -> vector<2x1xf32>
    %c0_108 = arith.constant 0 : index
    %c0_109 = arith.constant 0 : index
    %137 = vector.load %arg15[%c0_108, %c0_109] : memref<2x1xf32, #tpu.memory_space<vmem>>, vector<2x1xf32>
    tpu.vector_store %arg15[%c0_108, %c0_109], %136 {strides = array<i32>} : memref<2x1xf32, #tpu.memory_space<vmem>>, vector<2x1xf32>,
    return
  }
}

</mosaic_0001>

<llo_original>
// kernel: discriminator_forward.1
$region0: #{discriminator_forward.1}
  #allocation0 [shape = 'u32[]', space=smem, size = 0x4, offset = 0x4, fixed_abs, tag = 'smem constant byte address 0x4 - core index']
  #allocation1 [shape = 'u32[144,128]{1,0:T(1,128)}', space=vmem, size = 0x12000, scoped, tag = 'internal scratch']
  #allocation2 [shape = 'f32[68,8]{1,0:T(8,128)}', space=vmem, size = 0x9000, scoped, tag = 'scratch operand']
  #allocation3 [shape = 'f32[36,16]{1,0:T(8,128)}', space=vmem, size = 0x5000, scoped, tag = 'scratch operand']
  #allocation4 [shape = 'f32[20,32]{1,0:T(8,128)}', space=vmem, size = 0x3000, scoped, tag = 'scratch operand']
  #allocation5 [shape = 'f32[1,1]{1,0:T(1,128)S(1)}', space=vmem, size = 0x200, scoped, tag = 'scoped memory for discriminator_forward.1']
  %s0 = inlined_call_operand.vmem [shape: f32[64,4], index: 0, kind: input, shape index: {}]
  %s1 = inlined_call_operand.vmem [shape: f32[4,8], index: 1, kind: input, shape index: {}]
  %s2 = inlined_call_operand.vmem [shape: f32[1,8], index: 2, kind: input, shape index: {}]
  %s3 = inlined_call_operand.vmem [shape: f32[1,8], index: 3, kind: input, shape index: {}]
  %s4 = inlined_call_operand.vmem [shape: f32[32,16], index: 4, kind: input, shape index: {}]
  %s5 = inlined_call_operand.vmem [shape: f32[1,16], index: 5, kind: input, shape index: {}]
  %s6 = inlined_call_operand.vmem [shape: f32[1,16], index: 6, kind: input, shape index: {}]
  %s7 = inlined_call_operand.vmem [shape: f32[64,32], index: 7, kind: input, shape index: {}]
  %s8 = inlined_call_operand.vmem [shape: f32[1,32], index: 8, kind: input, shape index: {}]
  %s9 = inlined_call_operand.vmem [shape: f32[1,32], index: 9, kind: input, shape index: {}]
  %s10 = inlined_call_operand.vmem [shape: f32[128,64], index: 10, kind: input, shape index: {}]
  %s11 = inlined_call_operand.vmem [shape: f32[1,64], index: 11, kind: input, shape index: {}]
  %s12 = inlined_call_operand.vmem [shape: f32[1,64], index: 12, kind: input, shape index: {}]
  %s13 = inlined_call_operand.vmem [shape: f32[4,64], index: 13, kind: input, shape index: {}]
  %s14 = inlined_call_operand.<no memory space> [shape: f32[1,1], index: 14, kind: input, shape index: {}]
  %s15 = inlined_call_operand.vmem [shape: f32[2,1], index: 15, kind: output, shape index: {}]
  %s16 = sld [smem:[#allocation0]]
  $region70: #{discriminator_forward.1} parent=0
    _
  %s18 = ssub.s32 1, %s16
  %s19 = scalar_select 0, %s18, %s16
  %v20 = vstv %s14
  %21 = vst [vmem:[#allocation5] sm:$0x1] %v20
  // Predicated region
  $region2: #{discriminator_forward.1} parent=0 // pred_check
    _
  $region3: #{discriminator_forward.1} parent=0 // pred_check_branch
    %23 = sbr.rel (0) target = $region5
  $region4: #{discriminator_forward.1} parent=0 // pred_region
    _
  $region5: #{discriminator_forward.1} parent=0 // pred_fallthru
    _
  // Predicated region
  $region6: #{discriminator_forward.1} parent=0 // pred_check
    _
  $region7: #{discriminator_forward.1} parent=0 // pred_check_branch
    %25 = sbr.rel (0) target = $region9
  $region8: #{discriminator_forward.1} parent=0 // pred_region
    _
  $region9: #{discriminator_forward.1} parent=0 // pred_fallthru
    _
  // Predicated region
  $region10: #{discriminator_forward.1} parent=0 // pred_check
    _
  $region11: #{discriminator_forward.1} parent=0 // pred_check_branch
    %27 = sbr.rel (0) target = $region13
  $region12: #{discriminator_forward.1} parent=0 // pred_region
    _
  $region13: #{discriminator_forward.1} parent=0 // pred_fallthru
    _
  // Predicated region
  $region14: #{discriminator_forward.1} parent=0 // pred_check
    _
  $region15: #{discriminator_forward.1} parent=0 // pred_check_branch
    %29 = sbr.rel (0) target = $region17
  $region16: #{discriminator_forward.1} parent=0 // pred_region
    _
  $region17: #{discriminator_forward.1} parent=0 // pred_fallthru
    _
  // Predicated region
  $region18: #{discriminator_forward.1} parent=0 // pred_check
    _
  $region19: #{discriminator_forward.1} parent=0 // pred_check_branch
    %31 = sbr.rel (0) target = $region21
  $region20: #{discriminator_forward.1} parent=0 // pred_region
    _
  $region21: #{discriminator_forward.1} parent=0 // pred_fallthru
    _
  // Predicated region
  $region22: #{discriminator_forward.1} parent=0 // pred_check
    _
  $region23: #{discriminator_forward.1} parent=0 // pred_check_branch
    %33 = sbr.rel (0) target = $region25
  $region24: #{discriminator_forward.1} parent=0 // pred_region
    _
  $region25: #{discriminator_forward.1} parent=0 // pred_fallthru
    _
  // Predicated region
  $region26: #{discriminator_forward.1} parent=0 // pred_check
    _
  $region27: #{discriminator_forward.1} parent=0 // pred_check_branch
    %35 = sbr.rel (0) target = $region29
  $region28: #{discriminator_forward.1} parent=0 // pred_region
    _
  $region29: #{discriminator_forward.1} parent=0 // pred_fallthru
    _
  // Predicated region
  $region30: #{discriminator_forward.1} parent=0 // pred_check
    _
  $region31: #{discriminator_forward.1} parent=0 // pred_check_branch
    %37 = sbr.rel (0) target = $region33
  $region32: #{discriminator_forward.1} parent=0 // pred_region
    _
  $region33: #{discriminator_forward.1} parent=0 // pred_fallthru
    _
  // Predicated region
  $region34: #{discriminator_forward.1} parent=0 // pred_check
    _
  $region35: #{discriminator_forward.1} parent=0 // pred_check_branch
    %39 = sbr.rel (0) target = $region37
  $region36: #{discriminator_forward.1} parent=0 // pred_region
    _
  $region37: #{discriminator_forward.1} parent=0 // pred_fallthru
    _
  // Predicated region
  $region38: #{discriminator_forward.1} parent=0 // pred_check
    _
  $region39: #{discriminator_forward.1} parent=0 // pred_check_branch
    %41 = sbr.rel (0) target = $region41
  $region40: #{discriminator_forward.1} parent=0 // pred_region
    _
  $region41: #{discriminator_forward.1} parent=0 // pred_fallthru
    _
  // Predicated region
  $region42: #{discriminator_forward.1} parent=0 // pred_check
    _
  $region43: #{discriminator_forward.1} parent=0 // pred_check_branch
    %43 = sbr.rel (0) target = $region45
  $region44: #{discriminator_forward.1} parent=0 // pred_region
    _
  $region45: #{discriminator_forward.1} parent=0 // pred_fallthru
    _
  // Predicated region
  $region46: #{discriminator_forward.1} parent=0 // pred_check
    _
  $region47: #{discriminator_forward.1} parent=0 // pred_check_branch
    %45 = sbr.rel (0) target = $region49
  $region48: #{discriminator_forward.1} parent=0 // pred_region
    _
  $region49: #{discriminator_forward.1} parent=0 // pred_fallthru
    _
  // Predicated region
  $region50: #{discriminator_forward.1} parent=0 // pred_check
    _
  $region51: #{discriminator_forward.1} parent=0 // pred_check_branch
    %47 = sbr.rel (0) target = $region53
  $region52: #{discriminator_forward.1} parent=0 // pred_region
    _
  $region53: #{discriminator_forward.1} parent=0 // pred_fallthru
    _
  // Predicated region
  $region54: #{discriminator_forward.1} parent=0 // pred_check
    _
  $region55: #{discriminator_forward.1} parent=0 // pred_check_branch
    %49 = sbr.rel (0) target = $region57
  $region56: #{discriminator_forward.1} parent=0 // pred_region
    _
  $region57: #{discriminator_forward.1} parent=0 // pred_fallthru
    _
  // Predicated region
  $region58: #{discriminator_forward.1} parent=0 // pred_check
    _
  $region59: #{discriminator_forward.1} parent=0 // pred_check_branch
    %51 = sbr.rel (0) target = $region61
  $region60: #{discriminator_forward.1} parent=0 // pred_region
    _
  $region61: #{discriminator_forward.1} parent=0 // pred_fallthru
    _
  %vm52 = vcmask 64512
  %53 = vst.msk [vmem:[#allocation2] sm:$0xff] %vm52, 0.0
  %54 = vst.msk [vmem:[#allocation2 + $0x8] sm:$0xff] %vm52, 0.0
  %55 = vst.msk [vmem:[#allocation2 + $0x10] sm:$0xff] %vm52, 0.0
  %56 = vst.msk [vmem:[#allocation2 + $0x18] sm:$0xff] %vm52, 0.0
  %57 = vst.msk [vmem:[#allocation2 + $0x20] sm:$0xff] %vm52, 0.0
  %58 = vst.msk [vmem:[#allocation2 + $0x28] sm:$0xff] %vm52, 0.0
  %59 = vst.msk [vmem:[#allocation2 + $0x30] sm:$0xff] %vm52, 0.0
  %60 = vst.msk [vmem:[#allocation2 + $0x38] sm:$0xff] %vm52, 0.0
  %vm61 = vcmask 60416
  %62 = vst.msk [vmem:[#allocation2 + $0x40] sm:$0xf] %vm61, 0.0
  %vm63 = vcmask 130048
  %64 = vst.msk [vmem:[#allocation3] sm:$0xff] %vm63, 0.0
  %65 = vst.msk [vmem:[#allocation3 + $0x8] sm:$0xff] %vm63, 0.0
  %66 = vst.msk [vmem:[#allocation3 + $0x10] sm:$0xff] %vm63, 0.0
  %67 = vst.msk [vmem:[#allocation3 + $0x18] sm:$0xff] %vm63, 0.0
  %vm68 = vcmask 125952
  %69 = vst.msk [vmem:[#allocation3 + $0x20] sm:$0xf] %vm68, 0.0
  %vm70 = vcmask 261120
  %71 = vst.msk [vmem:[#allocation4] sm:$0xff] %vm70, 0.0
  %72 = vst.msk [vmem:[#allocation4 + $0x8] sm:$0xff] %vm70, 0.0
  %vm73 = vcmask 257024
  %74 = vst.msk [vmem:[#allocation4 + $0x10] sm:$0xf] %vm73, 0.0
  %v75 = vld [vmem:[%s0] sm:$0xff]
  %v76 = vld [vmem:[%s0 + $0x8] sm:$0xff]
  %v77 = vld [vmem:[%s0 + $0x10] sm:$0xff]
  %v78 = vld [vmem:[%s0 + $0x18] sm:$0xff]
  %v79 = vld [vmem:[%s0 + $0x20] sm:$0xff]
  %v80 = vld [vmem:[%s0 + $0x28] sm:$0xff]
  %v81 = vld [vmem:[%s0 + $0x30] sm:$0xff]
  %v82 = vld [vmem:[%s0 + $0x38] sm:$0xff]
  %v83 = vld [vmem:[%s1] sm:$0xf]
  %vm84 = vcmask 31744
  %v86 = vsel %vm84, %v75, 0
  %v89 = vsel %vm84, %v76, 0
  %v92 = vsel %vm84, %v77, 0
  %v95 = vsel %vm84, %v78, 0
  %v98 = vsel %vm84, %v79, 0
  %v101 = vsel %vm84, %v80, 0
  %v104 = vsel %vm84, %v81, 0
  %v107 = vsel %vm84, %v82, 0
  %vm109 = vcmask 1043456
  %v111 = vsel %vm109, %v83, 0
  %113 = vmatprep.subr.mxu0 0.0
  %114 = vmatpush1.msra.mxu0 %v111
  %115 = vmatprep.subr.mxu0 0.0
  %116 = vmatpush1.msra.mxu0 0.0
  %117 = vmatprep.subr.mxu0 0.0
  %118 = vmatpush1.msra.mxu0 0.0
  %119 = vmatprep.subr.mxu0 0.0
  %120 = vmatpush1.msra.mxu0 0.0
  %121 = vmatprep.subr.mxu0 0.0
  %122 = vmatpush1.msra.mxu0 0.0
  %123 = vmatprep.subr.mxu0 0.0
  %124 = vmatpush1.msra.mxu0 0.0
  %125 = vmatprep.subr.mxu0 0.0
  %126 = vmatpush1.msra.mxu0 0.0
  %127 = vmatprep.subr.mxu0 0.0
  %128 = vmatpush1.msra.mxu0 0.0
  %129 = vmatprep.subr.mxu0 0.0
  %130 = vmatpush1.msra.mxu0 0.0
  %131 = vmatprep.subr.mxu0 0.0
  %132 = vmatpush1.msra.mxu0 0.0
  %133 = vmatprep.subr.mxu0 0.0
  %134 = vmatpush1.msra.mxu0 0.0
  %135 = vmatprep.subr.mxu0 0.0
  %136 = vmatpush1.msra.mxu0 0.0
  %137 = vmatprep.subr.mxu0 0.0
  %138 = vmatpush1.msra.mxu0 0.0
  %139 = vmatprep.subr.mxu0 0.0
  %140 = vmatpush1.msra.mxu0 0.0
  %141 = vmatprep.subr.mxu0 0.0
  %142 = vmatpush1.msra.mxu0 0.0
  %143 = vmatprep.subr.mxu0 0.0
  %144 = vmatpush1.msra.mxu0 0.0
  %145 = vmatprep.subr.mxu0 0.0
  %146 = vmatpush1.msra.mxu0 0.0
  %147 = vmatprep.subr.mxu0 0.0
  %148 = vmatpush1.msra.mxu0 0.0
  %149 = vmatprep.subr.mxu0 0.0
  %150 = vmatpush1.msra.mxu0 0.0
  %151 = vmatprep.subr.mxu0 0.0
  %152 = vmatpush1.msra.mxu0 0.0
  %153 = vmatprep.subr.mxu0 0.0
  %154 = vmatpush1.msra.mxu0 0.0
  %155 = vmatprep.subr.mxu0 0.0
  %156 = vmatpush1.msra.mxu0 0.0
  %157 = vmatprep.subr.mxu0 0.0
  %158 = vmatpush1.msra.mxu0 0.0
  %159 = vmatprep.subr.mxu0 0.0
  %160 = vmatpush1.msra.mxu0 0.0
  %161 = vmatprep.subr.mxu0 0.0
  %162 = vmatpush1.msra.mxu0 0.0
  %163 = vmatprep.subr.mxu0 0.0
  %164 = vmatpush1.msra.mxu0 0.0
  %165 = vmatprep.subr.mxu0 0.0
  %166 = vmatpush1.msra.mxu0 0.0
  %167 = vmatprep.subr.mxu0 0.0
  %168 = vmatpush1.msra.mxu0 0.0
  %169 = vmatprep.subr.mxu0 0.0
  %170 = vmatpush1.msra.mxu0 0.0
  %171 = vmatprep.subr.mxu0 0.0
  %172 = vmatpush1.msra.mxu0 0.0
  %173 = vmatprep.subr.mxu0 0.0
  %174 = vmatpush1.msra.mxu0 0.0
  %175 = vmatprep.subr.mxu0 0.0
  %176 = vmatpush1.msra.mxu0 0.0
  %177 = vmatprep.mubr.f32.mxu0 0.0
  %178 = vmatmul.mubr.f32.gmra.mrb[0].mxu0 %v86
  %v179 = vpop.f32.mrb[0].mxu0
  %v180 = vadd.f32 0.0, %v179
  %v181 = vpop.f32.mrb[0].mxu0
  %182 = vmatprep.mubr.f32.mxu0 0.0
  %183 = vmatmul.mubr.f32.gmra.mrb[0].mxu0 %v89
  %v184 = vpop.f32.mrb[0].mxu0
  %v185 = vadd.f32 0.0, %v184
  %v186 = vpop.f32.mrb[0].mxu0
  %187 = vmatprep.mubr.f32.mxu0 0.0
  %188 = vmatmul.mubr.f32.gmra.mrb[0].mxu0 %v92
  %v189 = vpop.f32.mrb[0].mxu0
  %v190 = vadd.f32 0.0, %v189
  %v191 = vpop.f32.mrb[0].mxu0
  %192 = vmatprep.mubr.f32.mxu0 0.0
  %193 = vmatmul.mubr.f32.gmra.mrb[0].mxu0 %v95
  %v194 = vpop.f32.mrb[0].mxu0
  %v195 = vadd.f32 0.0, %v194
  %v196 = vpop.f32.mrb[0].mxu0
  %197 = vmatprep.mubr.f32.mxu0 0.0
  %198 = vmatmul.mubr.f32.gmra.mrb[0].mxu0 %v98
  %v199 = vpop.f32.mrb[0].mxu0
  %v200 = vadd.f32 0.0, %v199
  %v201 = vpop.f32.mrb[0].mxu0
  %202 = vmatprep.mubr.f32.mxu0 0.0
  %203 = vmatmul.mubr.f32.gmra.mrb[0].mxu0 %v101
  %v204 = vpop.f32.mrb[0].mxu0
  %v205 = vadd.f32 0.0, %v204
  %v206 = vpop.f32.mrb[0].mxu0
  %207 = vmatprep.mubr.f32.mxu0 0.0
  %208 = vmatmul.mubr.f32.gmra.mrb[0].mxu0 %v104
  %v209 = vpop.f32.mrb[0].mxu0
  %v210 = vadd.f32 0.0, %v209
  %v211 = vpop.f32.mrb[0].mxu0
  %212 = vmatprep.mubr.f32.mxu0 0.0
  %213 = vmatmul.mubr.f32.gmra.mrb[0].mxu0 %v107
  %v214 = vpop.f32.mrb[0].mxu0
  %v215 = vadd.f32 0.0, %v214
  %v216 = vpop.f32.mrb[0].mxu0
  %217 = vdwg.mxu0
  %v218 = vld [vmem:[%s2] sm:$0x1]
  %v220 = vlaneseq
  %v221 = vshrl.u32 %v220, 7
  %v222 = vsub.s32 0, %v221
  %v223 = vrot.slane %v218, %v222
  %v225 = vmul.f32 %v180, %v223
  %v226 = vmul.f32 %v185, %v223
  %v227 = vmul.f32 %v190, %v223
  %v228 = vmul.f32 %v195, %v223
  %v229 = vmul.f32 %v200, %v223
  %v230 = vmul.f32 %v205, %v223
  %v231 = vmul.f32 %v210, %v223
  %v232 = vmul.f32 %v215, %v223
  %v233 = vld [vmem:[%s3] sm:$0x1]
  %v235 = vlaneseq
  %v236 = vshrl.u32 %v235, 7
  %v237 = vsub.s32 0, %v236
  %v238 = vrot.slane %v233, %v237
  %v240 = vadd.f32 %v225, %v238
  %v241 = vadd.f32 %v226, %v238
  %v242 = vadd.f32 %v227, %v238
  %v243 = vadd.f32 %v228, %v238
  %v244 = vadd.f32 %v229, %v238
  %v245 = vadd.f32 %v230, %v238
  %v246 = vadd.f32 %v231, %v238
  %v247 = vadd.f32 %v232, %v238
  %vm248 = vcmp.ge.f32.partialorder %v240, 0.0
  %vm249 = vcmp.ge.f32.partialorder %v241, 0.0
  %vm250 = vcmp.ge.f32.partialorder %v242, 0.0
  %vm251 = vcmp.ge.f32.partialorder %v243, 0.0
  %vm252 = vcmp.ge.f32.partialorder %v244, 0.0
  %vm253 = vcmp.ge.f32.partialorder %v245, 0.0
  %vm254 = vcmp.ge.f32.partialorder %v246, 0.0
  %vm255 = vcmp.ge.f32.partialorder %v247, 0.0
  %v256 = vmul.f32 %v240, 0.2
  %v257 = vmul.f32 %v241, 0.2
  %v258 = vmul.f32 %v242, 0.2
  %v259 = vmul.f32 %v243, 0.2
  %v260 = vmul.f32 %v244, 0.2
  %v261 = vmul.f32 %v245, 0.2
  %v262 = vmul.f32 %v246, 0.2
  %v263 = vmul.f32 %v247, 0.2
  %v264 = vsel %vm248, %v240, %v256
  %v265 = vsel %vm249, %v241, %v257
  %v266 = vsel %vm250, %v242, %v258
  %v267 = vsel %vm251, %v243, %v259
  %v268 = vsel %vm252, %v244, %v260
  %v269 = vsel %vm253, %v245, %v261
  %v270 = vsel %vm254, %v246, %v262
  %v271 = vsel %vm255, %v247, %v263
  %272 = vst.msk [vmem:[#allocation2 + $0x1] sm:$0xff] %vm52, %v264
  %273 = vst.msk [vmem:[#allocation2 + $0x9] sm:$0xff] %vm52, %v265
  %274 = vst.msk [vmem:[#allocation2 + $0x11] sm:$0xff] %vm52, %v266
  %275 = vst.msk [vmem:[#allocation2 + $0x19] sm:$0xff] %vm52, %v267
  %276 = vst.msk [vmem:[#allocation2 + $0x23] sm:$0xff] %vm52, %v268
  %277 = vst.msk [vmem:[#allocation2 + $0x2b] sm:$0xff] %vm52, %v269
  %278 = vst.msk [vmem:[#allocation2 + $0x33] sm:$0xff] %vm52, %v270
  %279 = vst.msk [vmem:[#allocation2 + $0x3b] sm:$0xff] %vm52, %v271
  %v280 = vld [vmem:[#allocation2] ss:$2 sm:$0xff]
  %s281 = scalar_lea.vmem [#allocation2], 16
  %v282 = vld [vmem:[%s281] ss:$2 sm:$0xff]
  %s283 = scalar_lea.vmem [#allocation2], 1
  %v284 = vld [vmem:[%s283] ss:$2 sm:$0xff]
  %s285 = scalar_lea.vmem [#allocation2], 17
  %v286 = vld [vmem:[%s285] ss:$2 sm:$0xff]
  %s287 = scalar_lea.vmem [#allocation2], 2
  %v288 = vld [vmem:[%s287] ss:$2 sm:$0xff]
  %s289 = scalar_lea.vmem [#allocation2], 18
  %v290 = vld [vmem:[%s289] ss:$2 sm:$0xff]
  %s291 = scalar_lea.vmem [#allocation2], 3
  %v292 = vld [vmem:[%s291] ss:$2 sm:$0xff]
  %s293 = scalar_lea.vmem [#allocation2], 19
  %v294 = vld [vmem:[%s293] ss:$2 sm:$0xff]
  %297 = vrot.lane.b32.xlu0 %v284, 8
  %v298 = vpop.permute.xlu0 %297
  %299 = vrot.lane.b32.xlu0 %v286, 8
  %v300 = vpop.permute.xlu0 %299
  %305 = vrot.lane.b32.xlu0 %v288, 16
  %v306 = vpop.permute.xlu0 %305
  %307 = vrot.lane.b32.xlu0 %v290, 16
  %v308 = vpop.permute.xlu0 %307
  %313 = vrot.lane.b32.xlu0 %v292, 24
  %v314 = vpop.permute.xlu0 %313
  %315 = vrot.lane.b32.xlu0 %v294, 24
  %v316 = vpop.permute.xlu0 %315
  %v319 = vsel %vm52, %v280, %v298
  %v320 = vsel %vm52, %v282, %v300
  %v321 = vsel %vm63, %v319, %v306
  %v322 = vsel %vm63, %v320, %v308
  %vm323 = vcmask 195584
  %v324 = vsel %vm323, %v321, %v314
  %v325 = vsel %vm323, %v322, %v316
  %s326 = scalar_lea.vmem [#allocation2], 34
  %v327 = vld [vmem:[%s326] ss:$2 sm:$0xff]
  %s328 = scalar_lea.vmem [#allocation2], 50
  %v329 = vld [vmem:[%s328] ss:$2 sm:$0xff]
  %s330 = scalar_lea.vmem [#allocation2], 35
  %v331 = vld [vmem:[%s330] ss:$2 sm:$0xff]
  %s332 = scalar_lea.vmem [#allocation2], 51
  %v333 = vld [vmem:[%s332] ss:$2 sm:$0xff]
  %s334 = scalar_lea.vmem [#allocation2], 36
  %v335 = vld [vmem:[%s334] ss:$2 sm:$0xff]
  %s336 = scalar_lea.vmem [#allocation2], 52
  %v337 = vld [vmem:[%s336] ss:$2 sm:$0xff]
  %s338 = scalar_lea.vmem [#allocation2], 37
  %v339 = vld [vmem:[%s338] ss:$2 sm:$0xff]
  %s340 = scalar_lea.vmem [#allocation2], 53
  %v341 = vld [vmem:[%s340] ss:$2 sm:$0xff]
  %344 = vrot.lane.b32.xlu0 %v331, 8
  %v345 = vpop.permute.xlu0 %344
  %346 = vrot.lane.b32.xlu0 %v333, 8
  %v347 = vpop.permute.xlu0 %346
  %352 = vrot.lane.b32.xlu0 %v335, 16
  %v353 = vpop.permute.xlu0 %352
  %354 = vrot.lane.b32.xlu0 %v337, 16
  %v355 = vpop.permute.xlu0 %354
  %360 = vrot.lane.b32.xlu0 %v339, 24
  %v361 = vpop.permute.xlu0 %360
  %362 = vrot.lane.b32.xlu0 %v341, 24
  %v363 = vpop.permute.xlu0 %362
  %v366 = vsel %vm52, %v327, %v345
  %v367 = vsel %vm52, %v329, %v347
  %v368 = vsel %vm63, %v366, %v353
  %v369 = vsel %vm63, %v367, %v355
  %v370 = vsel %vm323, %v368, %v361
  %v371 = vsel %vm323, %v369, %v363
  %v372 = vld [vmem:[%s4] sm:$0xff]
  %v373 = vld [vmem:[%s4 + $0x8] sm:$0xff]
  %v374 = vld [vmem:[%s4 + $0x10] sm:$0xff]
  %v375 = vld [vmem:[%s4 + $0x18] sm:$0xff]
  %v377 = vsel %vm70, %v324, 0
  %v380 = vsel %vm70, %v325, 0
  %v383 = vsel %vm70, %v370, 0
  %v386 = vsel %vm70, %v371, 0
  %388 = vmatprep.subr.mxu0 0.0
  %389 = vmatpush1.msra.mxu0 %v372
  %390 = vmatprep.subr.mxu0 0.0
  %391 = vmatpush1.msra.mxu0 %v373
  %392 = vmatprep.subr.mxu0 0.0
  %393 = vmatpush1.msra.mxu0 %v374
  %394 = vmatprep.subr.mxu0 0.0
  %395 = vmatpush1.msra.mxu0 %v375
  %396 = vmatprep.subr.mxu0 0.0
  %397 = vmatpush1.msra.mxu0 0.0
  %398 = vmatprep.subr.mxu0 0.0
  %399 = vmatpush1.msra.mxu0 0.0
  %400 = vmatprep.subr.mxu0 0.0
  %401 = vmatpush1.msra.mxu0 0.0
  %402 = vmatprep.subr.mxu0 0.0
  %403 = vmatpush1.msra.mxu0 0.0
  %404 = vmatprep.subr.mxu0 0.0
  %405 = vmatpush1.msra.mxu0 0.0
  %406 = vmatprep.subr.mxu0 0.0
  %407 = vmatpush1.msra.mxu0 0.0
  %408 = vmatprep.subr.mxu0 0.0
  %409 = vmatpush1.msra.mxu0 0.0
  %410 = vmatprep.subr.mxu0 0.0
  %411 = vmatpush1.msra.mxu0 0.0
  %412 = vmatprep.subr.mxu0 0.0
  %413 = vmatpush1.msra.mxu0 0.0
  %414 = vmatprep.subr.mxu0 0.0
  %415 = vmatpush1.msra.mxu0 0.0
  %416 = vmatprep.subr.mxu0 0.0
  %417 = vmatpush1.msra.mxu0 0.0
  %418 = vmatprep.subr.mxu0 0.0
  %419 = vmatpush1.msra.mxu0 0.0
  %420 = vmatprep.subr.mxu0 0.0
  %421 = vmatpush1.msra.mxu0 0.0
  %422 = vmatprep.subr.mxu0 0.0
  %423 = vmatpush1.msra.mxu0 0.0
  %424 = vmatprep.subr.mxu0 0.0
  %425 = vmatpush1.msra.mxu0 0.0
  %426 = vmatprep.subr.mxu0 0.0
  %427 = vmatpush1.msra.mxu0 0.0
  %428 = vmatprep.subr.mxu0 0.0
  %429 = vmatpush1.msra.mxu0 0.0
  %430 = vmatprep.subr.mxu0 0.0
  %431 = vmatpush1.msra.mxu0 0.0
  %432 = vmatprep.subr.mxu0 0.0
  %433 = vmatpush1.msra.mxu0 0.0
  %434 = vmatprep.subr.mxu0 0.0
  %435 = vmatpush1.msra.mxu0 0.0
  %436 = vmatprep.subr.mxu0 0.0
  %437 = vmatpush1.msra.mxu0 0.0
  %438 = vmatprep.subr.mxu0 0.0
  %439 = vmatpush1.msra.mxu0 0.0
  %440 = vmatprep.subr.mxu0 0.0
  %441 = vmatpush1.msra.mxu0 0.0
  %442 = vmatprep.subr.mxu0 0.0
  %443 = vmatpush1.msra.mxu0 0.0
  %444 = vmatprep.subr.mxu0 0.0
  %445 = vmatpush1.msra.mxu0 0.0
  %446 = vmatprep.subr.mxu0 0.0
  %447 = vmatpush1.msra.mxu0 0.0
  %448 = vmatprep.subr.mxu0 0.0
  %449 = vmatpush1.msra.mxu0 0.0
  %450 = vmatprep.subr.mxu0 0.0
  %451 = vmatpush1.msra.mxu0 0.0
  %452 = vmatprep.mubr.f32.mxu0 0.0
  %453 = vmatmul.mubr.f32.gmra.mrb[0].mxu0 %v377
  %v454 = vpop.f32.mrb[0].mxu0
  %v455 = vadd.f32 0.0, %v454
  %v456 = vpop.f32.mrb[0].mxu0
  %457 = vmatprep.mubr.f32.mxu0 0.0
  %458 = vmatmul.mubr.f32.gmra.mrb[0].mxu0 %v380
  %v459 = vpop.f32.mrb[0].mxu0
  %v460 = vadd.f32 0.0, %v459
  %v461 = vpop.f32.mrb[0].mxu0
  %462 = vmatprep.mubr.f32.mxu0 0.0
  %463 = vmatmul.mubr.f32.gmra.mrb[0].mxu0 %v383
  %v464 = vpop.f32.mrb[0].mxu0
  %v465 = vadd.f32 0.0, %v464
  %v466 = vpop.f32.mrb[0].mxu0
  %467 = vmatprep.mubr.f32.mxu0 0.0
  %468 = vmatmul.mubr.f32.gmra.mrb[0].mxu0 %v386
  %v469 = vpop.f32.mrb[0].mxu0
  %v470 = vadd.f32 0.0, %v469
  %v471 = vpop.f32.mrb[0].mxu0
  %472 = vdwg.mxu0
  %v473 = vld [vmem:[%s5] sm:$0x1]
  %v475 = vlaneseq
  %v476 = vshrl.u32 %v475, 7
  %v477 = vsub.s32 0, %v476
  %v478 = vrot.slane %v473, %v477
  %v480 = vmul.f32 %v455, %v478
  %v481 = vmul.f32 %v460, %v478
  %v482 = vmul.f32 %v465, %v478
  %v483 = vmul.f32 %v470, %v478
  %v484 = vld [vmem:[%s6] sm:$0x1]
  %v486 = vlaneseq
  %v487 = vshrl.u32 %v486, 7
  %v488 = vsub.s32 0, %v487
  %v489 = vrot.slane %v484, %v488
  %v491 = vadd.f32 %v480, %v489
  %v492 = vadd.f32 %v481, %v489
  %v493 = vadd.f32 %v482, %v489
  %v494 = vadd.f32 %v483, %v489
  %vm495 = vcmp.ge.f32.partialorder %v491, 0.0
  %vm496 = vcmp.ge.f32.partialorder %v492, 0.0
  %vm497 = vcmp.ge.f32.partialorder %v493, 0.0
  %vm498 = vcmp.ge.f32.partialorder %v494, 0.0
  %v499 = vmul.f32 %v491, 0.2
  %v500 = vmul.f32 %v492, 0.2
  %v501 = vmul.f32 %v493, 0.2
  %v502 = vmul.f32 %v494, 0.2
  %v503 = vsel %vm495, %v491, %v499
  %v504 = vsel %vm496, %v492, %v500
  %v505 = vsel %vm497, %v493, %v501
  %v506 = vsel %vm498, %v494, %v502
  %507 = vst.msk [vmem:[#allocation3 + $0x1] sm:$0xff] %vm63, %v503
  %508 = vst.msk [vmem:[#allocation3 + $0x9] sm:$0xff] %vm63, %v504
  %509 = vst.msk [vmem:[#allocation3 + $0x13] sm:$0xff] %vm63, %v505
  %510 = vst.msk [vmem:[#allocation3 + $0x1b] sm:$0xff] %vm63, %v506
  %v511 = vld [vmem:[#allocation3] ss:$2 sm:$0xff]
  %s512 = scalar_lea.vmem [#allocation3], 1
  %v513 = vld [vmem:[%s512] ss:$2 sm:$0xff]
  %s514 = scalar_lea.vmem [#allocation3], 2
  %v515 = vld [vmem:[%s514] ss:$2 sm:$0xff]
  %s516 = scalar_lea.vmem [#allocation3], 3
  %v517 = vld [vmem:[%s516] ss:$2 sm:$0xff]
  %519 = vrot.lane.b32.xlu0 %v513, 16
  %v520 = vpop.permute.xlu0 %519
  %523 = vrot.lane.b32.xlu0 %v515, 32
  %v524 = vpop.permute.xlu0 %523
  %527 = vrot.lane.b32.xlu0 %v517, 48
  %v528 = vpop.permute.xlu0 %527
  %v530 = vsel %vm63, %v511, %v520
  %v531 = vsel %vm70, %v530, %v524
  %vm532 = vcmask 392192
  %v533 = vsel %vm532, %v531, %v528
  %s534 = scalar_lea.vmem [#allocation3], 18
  %v535 = vld [vmem:[%s534] ss:$2 sm:$0xff]
  %s536 = scalar_lea.vmem [#allocation3], 19
  %v537 = vld [vmem:[%s536] ss:$2 sm:$0xff]
  %s538 = scalar_lea.vmem [#allocation3], 20
  %v539 = vld [vmem:[%s538] ss:$2 sm:$0xff]
  %s540 = scalar_lea.vmem [#allocation3], 21
  %v541 = vld [vmem:[%s540] ss:$2 sm:$0xff]
  %543 = vrot.lane.b32.xlu0 %v537, 16
  %v544 = vpop.permute.xlu0 %543
  %547 = vrot.lane.b32.xlu0 %v539, 32
  %v548 = vpop.permute.xlu0 %547
  %551 = vrot.lane.b32.xlu0 %v541, 48
  %v552 = vpop.permute.xlu0 %551
  %v554 = vsel %vm63, %v535, %v544
  %v555 = vsel %vm70, %v554, %v548
  %v556 = vsel %vm532, %v555, %v552
  %v557 = vld [vmem:[%s7] sm:$0xff]
  %v558 = vld [vmem:[%s7 + $0x8] sm:$0xff]
  %v559 = vld [vmem:[%s7 + $0x10] sm:$0xff]
  %v560 = vld [vmem:[%s7 + $0x18] sm:$0xff]
  %v561 = vld [vmem:[%s7 + $0x20] sm:$0xff]
  %v562 = vld [vmem:[%s7 + $0x28] sm:$0xff]
  %v563 = vld [vmem:[%s7 + $0x30] sm:$0xff]
  %v564 = vld [vmem:[%s7 + $0x38] sm:$0xff]
  %vm565 = vcmask 523264
  %v567 = vsel %vm565, %v533, 0
  %v570 = vsel %vm565, %v556, 0
  %572 = vmatprep.subr.mxu0 0.0
  %573 = vmatpush1.msra.mxu0 %v557
  %574 = vmatprep.subr.mxu0 0.0
  %575 = vmatpush1.msra.mxu0 %v558
  %576 = vmatprep.subr.mxu0 0.0
  %577 = vmatpush1.msra.mxu0 %v559
  %578 = vmatprep.subr.mxu0 0.0
  %579 = vmatpush1.msra.mxu0 %v560
  %580 = vmatprep.subr.mxu0 0.0
  %581 = vmatpush1.msra.mxu0 %v561
  %582 = vmatprep.subr.mxu0 0.0
  %583 = vmatpush1.msra.mxu0 %v562
  %584 = vmatprep.subr.mxu0 0.0
  %585 = vmatpush1.msra.mxu0 %v563
  %586 = vmatprep.subr.mxu0 0.0
  %587 = vmatpush1.msra.mxu0 %v564
  %588 = vmatprep.subr.mxu0 0.0
  %589 = vmatpush1.msra.mxu0 0.0
  %590 = vmatprep.subr.mxu0 0.0
  %591 = vmatpush1.msra.mxu0 0.0
  %592 = vmatprep.subr.mxu0 0.0
  %593 = vmatpush1.msra.mxu0 0.0
  %594 = vmatprep.subr.mxu0 0.0
  %595 = vmatpush1.msra.mxu0 0.0
  %596 = vmatprep.subr.mxu0 0.0
  %597 = vmatpush1.msra.mxu0 0.0
  %598 = vmatprep.subr.mxu0 0.0
  %599 = vmatpush1.msra.mxu0 0.0
  %600 = vmatprep.subr.mxu0 0.0
  %601 = vmatpush1.msra.mxu0 0.0
  %602 = vmatprep.subr.mxu0 0.0
  %603 = vmatpush1.msra.mxu0 0.0
  %604 = vmatprep.subr.mxu0 0.0
  %605 = vmatpush1.msra.mxu0 0.0
  %606 = vmatprep.subr.mxu0 0.0
  %607 = vmatpush1.msra.mxu0 0.0
  %608 = vmatprep.subr.mxu0 0.0
  %609 = vmatpush1.msra.mxu0 0.0
  %610 = vmatprep.subr.mxu0 0.0
  %611 = vmatpush1.msra.mxu0 0.0
  %612 = vmatprep.subr.mxu0 0.0
  %613 = vmatpush1.msra.mxu0 0.0
  %614 = vmatprep.subr.mxu0 0.0
  %615 = vmatpush1.msra.mxu0 0.0
  %616 = vmatprep.subr.mxu0 0.0
  %617 = vmatpush1.msra.mxu0 0.0
  %618 = vmatprep.subr.mxu0 0.0
  %619 = vmatpush1.msra.mxu0 0.0
  %620 = vmatprep.subr.mxu0 0.0
  %621 = vmatpush1.msra.mxu0 0.0
  %622 = vmatprep.subr.mxu0 0.0
  %623 = vmatpush1.msra.mxu0 0.0
  %624 = vmatprep.subr.mxu0 0.0
  %625 = vmatpush1.msra.mxu0 0.0
  %626 = vmatprep.subr.mxu0 0.0
  %627 = vmatpush1.msra.mxu0 0.0
  %628 = vmatprep.subr.mxu0 0.0
  %629 = vmatpush1.msra.mxu0 0.0
  %630 = vmatprep.subr.mxu0 0.0
  %631 = vmatpush1.msra.mxu0 0.0
  %632 = vmatprep.subr.mxu0 0.0
  %633 = vmatpush1.msra.mxu0 0.0
  %634 = vmatprep.subr.mxu0 0.0
  %635 = vmatpush1.msra.mxu0 0.0
  %636 = vmatprep.mubr.f32.mxu0 0.0
  %637 = vmatmul.mubr.f32.gmra.mrb[0].mxu0 %v567
  %v638 = vpop.f32.mrb[0].mxu0
  %v639 = vadd.f32 0.0, %v638
  %v640 = vpop.f32.mrb[0].mxu0
  %641 = vmatprep.mubr.f32.mxu0 0.0
  %642 = vmatmul.mubr.f32.gmra.mrb[0].mxu0 %v570
  %v643 = vpop.f32.mrb[0].mxu0
  %v644 = vadd.f32 0.0, %v643
  %v645 = vpop.f32.mrb[0].mxu0
  %646 = vdwg.mxu0
  %v647 = vld [vmem:[%s8] sm:$0x1]
  %v649 = vlaneseq
  %v650 = vshrl.u32 %v649, 7
  %v651 = vsub.s32 0, %v650
  %v652 = vrot.slane %v647, %v651
  %v654 = vmul.f32 %v639, %v652
  %v655 = vmul.f32 %v644, %v652
  %v656 = vld [vmem:[%s9] sm:$0x1]
  %v658 = vlaneseq
  %v659 = vshrl.u32 %v658, 7
  %v660 = vsub.s32 0, %v659
  %v661 = vrot.slane %v656, %v660
  %v663 = vadd.f32 %v654, %v661
  %v664 = vadd.f32 %v655, %v661
  %vm665 = vcmp.ge.f32.partialorder %v663, 0.0
  %vm666 = vcmp.ge.f32.partialorder %v664, 0.0
  %v667 = vmul.f32 %v663, 0.2
  %v668 = vmul.f32 %v664, 0.2
  %v669 = vsel %vm665, %v663, %v667
  %v670 = vsel %vm666, %v664, %v668
  %671 = vst.msk [vmem:[#allocation4 + $0x1] sm:$0xff] %vm70, %v669
  %672 = vst.msk [vmem:[#allocation4 + $0xb] sm:$0xff] %vm70, %v670
  %v673 = vld [vmem:[#allocation4] ss:$2 sm:$0xf]
  %s674 = scalar_lea.vmem [#allocation4], 1
  %v675 = vld [vmem:[%s674] ss:$2 sm:$0xf]
  %s676 = scalar_lea.vmem [#allocation4], 2
  %v677 = vld [vmem:[%s676] ss:$2 sm:$0xf]
  %s678 = scalar_lea.vmem [#allocation4], 3
  %v679 = vld [vmem:[%s678] ss:$2 sm:$0xf]
  %681 = vrot.lane.b32.xlu0 %v675, 32
  %v682 = vpop.permute.xlu0 %681
  %685 = vrot.lane.b32.xlu0 %v677, 64
  %v686 = vpop.permute.xlu0 %685
  %689 = vrot.lane.b32.xlu0 %v679, 96
  %v690 = vpop.permute.xlu0 %689
  %v692 = vsel %vm70, %v673, %v682
  %v693 = vsel %vm565, %v692, %v686
  %vm694 = vcmask 785408
  %v695 = vsel %vm694, %v693, %v690
  %s696 = scalar_lea.vmem [#allocation4], 10
  %v697 = vld [vmem:[%s696] ss:$2 sm:$0xf]
  %s698 = scalar_lea.vmem [#allocation4], 11
  %v699 = vld [vmem:[%s698] ss:$2 sm:$0xf]
  %s700 = scalar_lea.vmem [#allocation4], 12
  %v701 = vld [vmem:[%s700] ss:$2 sm:$0xf]
  %s702 = scalar_lea.vmem [#allocation4], 13
  %v703 = vld [vmem:[%s702] ss:$2 sm:$0xf]
  %705 = vrot.lane.b32.xlu0 %v699, 32
  %v706 = vpop.permute.xlu0 %705
  %709 = vrot.lane.b32.xlu0 %v701, 64
  %v710 = vpop.permute.xlu0 %709
  %713 = vrot.lane.b32.xlu0 %v703, 96
  %v714 = vpop.permute.xlu0 %713
  %v716 = vsel %vm70, %v697, %v706
  %v717 = vsel %vm565, %v716, %v710
  %v718 = vsel %vm694, %v717, %v714
  %v720 = vrot.slane %v718, 4
  %v722 = vsel %vm109, %v695, %v720
  %v723 = vld [vmem:[%s10] sm:$0xff]
  %v724 = vld [vmem:[%s10 + $0x8] sm:$0xff]
  %v725 = vld [vmem:[%s10 + $0x10] sm:$0xff]
  %v726 = vld [vmem:[%s10 + $0x18] sm:$0xff]
  %v727 = vld [vmem:[%s10 + $0x20] sm:$0xff]
  %v728 = vld [vmem:[%s10 + $0x28] sm:$0xff]
  %v729 = vld [vmem:[%s10 + $0x30] sm:$0xff]
  %v730 = vld [vmem:[%s10 + $0x38] sm:$0xff]
  %v731 = vld [vmem:[%s10 + $0x40] sm:$0xff]
  %v732 = vld [vmem:[%s10 + $0x48] sm:$0xff]
  %v733 = vld [vmem:[%s10 + $0x50] sm:$0xff]
  %v734 = vld [vmem:[%s10 + $0x58] sm:$0xff]
  %v735 = vld [vmem:[%s10 + $0x60] sm:$0xff]
  %v736 = vld [vmem:[%s10 + $0x68] sm:$0xff]
  %v737 = vld [vmem:[%s10 + $0x70] sm:$0xff]
  %v738 = vld [vmem:[%s10 + $0x78] sm:$0xff]
  %739 = vmatprep.subr.mxu0 0.0
  %740 = vmatpush1.msra.mxu0 %v723
  %741 = vmatprep.subr.mxu0 0.0
  %742 = vmatpush1.msra.mxu0 %v724
  %743 = vmatprep.subr.mxu0 0.0
  %744 = vmatpush1.msra.mxu0 %v725
  %745 = vmatprep.subr.mxu0 0.0
  %746 = vmatpush1.msra.mxu0 %v726
  %747 = vmatprep.subr.mxu0 0.0
  %748 = vmatpush1.msra.mxu0 %v727
  %749 = vmatprep.subr.mxu0 0.0
  %750 = vmatpush1.msra.mxu0 %v728
  %751 = vmatprep.subr.mxu0 0.0
  %752 = vmatpush1.msra.mxu0 %v729
  %753 = vmatprep.subr.mxu0 0.0
  %754 = vmatpush1.msra.mxu0 %v730
  %755 = vmatprep.subr.mxu0 0.0
  %756 = vmatpush1.msra.mxu0 %v731
  %757 = vmatprep.subr.mxu0 0.0
  %758 = vmatpush1.msra.mxu0 %v732
  %759 = vmatprep.subr.mxu0 0.0
  %760 = vmatpush1.msra.mxu0 %v733
  %761 = vmatprep.subr.mxu0 0.0
  %762 = vmatpush1.msra.mxu0 %v734
  %763 = vmatprep.subr.mxu0 0.0
  %764 = vmatpush1.msra.mxu0 %v735
  %765 = vmatprep.subr.mxu0 0.0
  %766 = vmatpush1.msra.mxu0 %v736
  %767 = vmatprep.subr.mxu0 0.0
  %768 = vmatpush1.msra.mxu0 %v737
  %769 = vmatprep.subr.mxu0 0.0
  %770 = vmatpush1.msra.mxu0 %v738
  %771 = vmatprep.subr.mxu0 0.0
  %772 = vmatpush1.msra.mxu0 0.0
  %773 = vmatprep.subr.mxu0 0.0
  %774 = vmatpush1.msra.mxu0 0.0
  %775 = vmatprep.subr.mxu0 0.0
  %776 = vmatpush1.msra.mxu0 0.0
  %777 = vmatprep.subr.mxu0 0.0
  %778 = vmatpush1.msra.mxu0 0.0
  %779 = vmatprep.subr.mxu0 0.0
  %780 = vmatpush1.msra.mxu0 0.0
  %781 = vmatprep.subr.mxu0 0.0
  %782 = vmatpush1.msra.mxu0 0.0
  %783 = vmatprep.subr.mxu0 0.0
  %784 = vmatpush1.msra.mxu0 0.0
  %785 = vmatprep.subr.mxu0 0.0
  %786 = vmatpush1.msra.mxu0 0.0
  %787 = vmatprep.subr.mxu0 0.0
  %788 = vmatpush1.msra.mxu0 0.0
  %789 = vmatprep.subr.mxu0 0.0
  %790 = vmatpush1.msra.mxu0 0.0
  %791 = vmatprep.subr.mxu0 0.0
  %792 = vmatpush1.msra.mxu0 0.0
  %793 = vmatprep.subr.mxu0 0.0
  %794 = vmatpush1.msra.mxu0 0.0
  %795 = vmatprep.subr.mxu0 0.0
  %796 = vmatpush1.msra.mxu0 0.0
  %797 = vmatprep.subr.mxu0 0.0
  %798 = vmatpush1.msra.mxu0 0.0
  %799 = vmatprep.subr.mxu0 0.0
  %800 = vmatpush1.msra.mxu0 0.0
  %801 = vmatprep.subr.mxu0 0.0
  %802 = vmatpush1.msra.mxu0 0.0
  %803 = vmatprep.mubr.f32.mxu0 0.0
  %804 = vmatmul.mubr.f32.gmra.mrb[0].mxu0 %v722
  %v805 = vpop.f32.mrb[0].mxu0
  %v806 = vadd.f32 0.0, %v805
  %v807 = vpop.f32.mrb[0].mxu0
  %808 = vdwg.mxu0
  %v809 = vld [vmem:[%s11] sm:$0x1]
  %v811 = vlaneseq
  %v812 = vshrl.u32 %v811, 7
  %v813 = vsub.s32 0, %v812
  %v814 = vrot.slane %v809, %v813
  %v816 = vmul.f32 %v806, %v814
  %v817 = vld [vmem:[%s12] sm:$0x1]
  %v819 = vlaneseq
  %v820 = vshrl.u32 %v819, 7
  %v821 = vsub.s32 0, %v820
  %v822 = vrot.slane %v817, %v821
  %v824 = vadd.f32 %v816, %v822
  %vm825 = vcmp.ge.f32.partialorder %v824, 0.0
  %v826 = vmul.f32 %v824, 0.2
  %v827 = vsel %vm825, %v824, %v826
  %v828 = vld [vmem:[%s13] sm:$0xf]
  %v829 = vmul.f32 %v827, %v828
  %vm830 = vcmask 519168
  %v831 = vsel %vm830, %v829, 0.0
  %832 = vadd.xlane.f32.xlu0 %v831
  %v833 = vpop.xlane.xlu0 %832
  %v834 = vsel %vm109, %v833, 0.0
  %v835 = vrot.slane %v834, 4
  %v836 = vadd.f32 %v834, %v835
  %v837 = vrot.slane %v836, 2
  %v838 = vadd.f32 %v836, %v837
  %v839 = vrot.slane %v838, 1
  %v840 = vadd.f32 %v838, %v839
  %v841 = vld [vmem:[#allocation5] sm:$0x1]
  %v842 = vadd.f32 %v840, %v841
  %v843 = vsub.f32 0.0, %v842
  %v844 = vmul.f32 %v843, 1.442695
  %v845 = vpow.pop %v844
  %v846 = vadd.f32 %v845, 1.0
  %v847 = vrcp.pop %v846
  %v848 = vmul.f32 1.0, %v847
  %v850 = vrot.slane %v828, 4
  %v852 = vmul.f32 %v827, %v850
  %vm853 = vcmask 523268
  %v854 = vsel %vm853, %v852, 0.0
  %855 = vadd.xlane.f32.xlu0 %v854
  %v856 = vpop.xlane.xlu0 %855
  %v858 = vrot.slane %v856, 4
  %v860 = vsel %vm109, %v858, 0.0
  %v861 = vrot.slane %v860, 4
  %v862 = vadd.f32 %v860, %v861
  %v863 = vrot.slane %v862, 2
  %v864 = vadd.f32 %v862, %v863
  %v865 = vrot.slane %v864, 1
  %v866 = vadd.f32 %v864, %v865
  %v867 = vadd.f32 %v866, %v841
  %v868 = vsub.f32 0.0, %v867
  %v869 = vmul.f32 %v868, 1.442695
  %v870 = vpow.pop %v869
  %v871 = vadd.f32 %v870, 1.0
  %v872 = vrcp.pop %v871
  %v873 = vmul.f32 1.0, %v872
  %v875 = vlaneseq
  %v876 = vshrl.u32 %v875, 7
  %v877 = vsub.s32 0, %v876
  %v878 = vrot.slane %v873, %v877
  %vm880 = vcmask 1040384
  %v881 = vsel %vm880, %v848, %v878
  %vm882 = vcmask 1024
  %883 = vst.msk [vmem:[%s15] sm:$0x3] %vm882, %v881
  // Predicated region
  $region62: #{discriminator_forward.1} parent=0 // pred_check
    _
  $region63: #{discriminator_forward.1} parent=0 // pred_check_branch
    %885 = sbr.rel (0) target = $region65
  $region64: #{discriminator_forward.1} parent=0 // pred_region
    _
  $region65: #{discriminator_forward.1} parent=0 // pred_fallthru
    _
  // Predicated region
  $region66: #{discriminator_forward.1} parent=0 // pred_check
    _
  $region67: #{discriminator_forward.1} parent=0 // pred_check_branch
    %887 = sbr.rel (0) target = $region69
  $region68: #{discriminator_forward.1} parent=0 // pred_region
    _
  $region69: #{discriminator_forward.1} parent=0 // pred_fallthru
    _

</llo_original>
